<compile_context>
chip_gen: v7x
topology: tpu7x:2x2x1
jax: 0.10.0
libtpu: 0.0.40
codegen_flags: <defaults>
</compile_context>

<pallas_src>
import jax
import jax.numpy as jnp
from jax.experimental import pallas as pl
from jax.experimental.pallas import tpu as pltpu


def ntn_kernel(xs_ref, w1_ref, w2_ref, b_ref, out_ref):
    """One block of TB pairs.

    xs_ref : (2, TB, F)   xs[0] = input1 rows, xs[1] = input2 rows
    w1_ref : (F, F)
    w2_ref : (2, F)       w2[0] = weight2[:F], w2[1] = weight2[F:]
    b_ref  : (1, O_pad)   bias zero-padded to a lane-dense width
    out_ref: (TB, O_pad)
    """
    x1 = xs_ref[0]                       # (TB, F)
    x2 = xs_ref[1]                       # (TB, F)

    # Bilinear term on the MXU: (TB, F) @ (F, F) -> (TB, F) in f32.
    x1w = jnp.dot(x1, w1_ref[...], preferred_element_type=jnp.float32)

    # Collapse the three reductions into a single lane reduce:
    #   output1 + output2 = sum((x1W + w2b) * x2 + w2a * x1)
    t = (x1w + w2_ref[1:2]) * x2 + w2_ref[0:1] * x1              # (TB, F), VPU
    s = jnp.sum(t, axis=-1, keepdims=True)                       # (TB, 1), one XLU reduce

    # Broadcast the per-pair scalar over the (padded) output features; tanh on EUP.
    out_ref[...] = jnp.tanh(s + b_ref[...])                      # (TB, O_pad)


def ntn_forward_batched(input1, input2, weight1, weight2, bias, *, block_b=128):
    """input1/input2: (B, F); weight1: (F, F); weight2: (2F,); bias: (O,) -> (B, O)."""
    B, F = input1.shape
    O = bias.shape[0]
    O_pad = pl.cdiv(O, 128) * 128                # lane-dense output width
    B_pad = pl.cdiv(B, block_b) * block_b        # pad batch to full blocks

    xs = jnp.stack([input1, input2], axis=0).astype(jnp.float32)   # (2, B, F)
    if B_pad != B:
        xs = jnp.pad(xs, ((0, 0), (0, B_pad - B), (0, 0)))
    w1 = weight1.astype(jnp.float32)                               # (F, F)
    w2 = weight2.reshape(2, F).astype(jnp.float32)                 # (2, F)
    b = jnp.zeros((1, O_pad), jnp.float32).at[0, :O].set(bias.astype(jnp.float32))

    out = pl.pallas_call(
        ntn_kernel,
        out_shape=jax.ShapeDtypeStruct((B_pad, O_pad), jnp.float32),
        grid_spec=pltpu.PrefetchScalarGridSpec(
            num_scalar_prefetch=0,
            grid=(B_pad // block_b,),
            in_specs=[
                pl.BlockSpec((2, block_b, F), lambda i: (0, i, 0)),   # packed x1/x2
                pl.BlockSpec((F, F), lambda i: (0, 0)),               # weight1 (resident)
                pl.BlockSpec((2, F), lambda i: (0, 0)),               # split weight2
                pl.BlockSpec((1, O_pad), lambda i: (0, 0)),           # padded bias
            ],
            out_specs=pl.BlockSpec((block_b, O_pad), lambda i: (i, 0)),
        ),
        compiler_params=pltpu.CompilerParams(
            dimension_semantics=("parallel",)),
    )(xs, w1, w2, b)
    return out[:B, :O]


def ntn_forward(input1, input2, weight1, weight2, bias):
    """Exact module semantics: one (F,) pair -> (O,)."""
    out = ntn_forward_batched(input1[None, :], input2[None, :],
                              weight1, weight2, bias)
    return out[0]


if __name__ == "__main__":
    in_features = 32
    out_features = 16
    batch = 8

    key = jax.random.PRNGKey(0)
    k_w1, k_w2, k_b, k_x1, k_x2 = jax.random.split(key, 5)

    # Deterministic parameter init mirroring reset_parameters():
    #   weight1: xavier_uniform -> U(-a, a), a = sqrt(6 / (fan_in + fan_out))
    #   weight2: U(0, 1); bias: U(0, 1)
    bound = (6.0 / (in_features + in_features)) ** 0.5
    weight1 = jax.random.uniform(
        k_w1, (in_features, in_features), jnp.float32, -bound, bound)
    weight2 = jax.random.uniform(k_w2, (2 * in_features,), jnp.float32, 0.0, 1.0)
    bias = jax.random.uniform(k_b, (out_features,), jnp.float32, 0.0, 1.0)

    x1 = jax.random.normal(k_x1, (batch, in_features), jnp.float32)
    x2 = jax.random.normal(k_x2, (batch, in_features), jnp.float32)

    # Batched kernel call (many pairs amortize launch/DMA overhead).
    out_b = jax.block_until_ready(
        ntn_forward_batched(x1, x2, weight1, weight2, bias))

    # Single-pair call (exact module semantics).
    out_1 = jax.block_until_ready(
        ntn_forward(x1[0], x2[0], weight1, weight2, bias))

    # Pure-JAX references.
    x1w = x1 @ weight1                                            # (B, F)
    o1 = jnp.sum(x1w * x2, axis=-1)                               # (B,)
    o2 = x1 @ weight2[:in_features] + x2 @ weight2[in_features:]  # (B,)
    ref_b = jnp.tanh((o1 + o2)[:, None] + bias[None, :])          # (B, O)

    ref_1 = jnp.tanh(
        jnp.dot(jnp.dot(x1[0], weight1), x2[0])
        + jnp.dot(weight2, jnp.concatenate([x1[0], x2[0]], axis=0))
        + bias)

    assert out_b.shape == (batch, out_features)
    assert out_1.shape == (out_features,)
    assert jnp.allclose(out_b, ref_b, atol=1e-5, rtol=1e-5)
    assert jnp.allclose(out_1, ref_1, atol=1e-5, rtol=1e-5)

    print("KERNEL_OK")
</pallas_src>

<mosaic_0001>
module attributes {stable_mosaic.version = 11 : i64} {
  func.func @ntn_kernel(%arg0: i32, %arg1: memref<2x128x32xf32, #tpu.memory_space<vmem>>, %arg2: memref<32x32xf32, #tpu.memory_space<vmem>>, %arg3: memref<2x32xf32, #tpu.memory_space<vmem>>, %arg4: memref<1x128xf32, #tpu.memory_space<vmem>>, %arg5: memref<128x128xf32, #tpu.memory_space<vmem>>) attributes {dimension_semantics = [#tpu.dimension_semantics<parallel>], iteration_bounds = array<i64: 1>, scalar_prefetch = 0 : i64, scratch_operands = 0 : i64, tpu.core_type = #tpu.core_type<tc>, window_params = [{transform_indices = @transform_0, window_bounds = array<i64: 2, 128, 32>}, {pipeline_mode = #tpu.pipeline_mode<synchronous>, transform_indices = @transform_1, window_bounds = array<i64: 32, 32>}, {pipeline_mode = #tpu.pipeline_mode<synchronous>, transform_indices = @transform_2, window_bounds = array<i64: 2, 32>}, {pipeline_mode = #tpu.pipeline_mode<synchronous>, transform_indices = @transform_3, window_bounds = array<i64: 1, 128>}, {transform_indices = @transform_4, window_bounds = array<i64: 128, 128>}]} {
    %c0 = arith.constant 0 : index
    %c0_0 = arith.constant 0 : index
    %c0_1 = arith.constant 0 : index
    %0 = vector.load %arg1[%c0, %c0_0, %c0_1] : memref<2x128x32xf32, #tpu.memory_space<vmem>>, vector<1x128x32xf32>
    %1 = vector.shape_cast %0 : vector<1x128x32xf32> to vector<128x32xf32>
    %c1 = arith.constant 1 : index
    %c0_2 = arith.constant 0 : index
    %c0_3 = arith.constant 0 : index
    %2 = vector.load %arg1[%c1, %c0_2, %c0_3] : memref<2x128x32xf32, #tpu.memory_space<vmem>>, vector<1x128x32xf32>
    %3 = vector.shape_cast %2 : vector<1x128x32xf32> to vector<128x32xf32>
    %c0_4 = arith.constant 0 : index
    %c0_5 = arith.constant 0 : index
    %4 = vector.load %arg2[%c0_4, %c0_5] : memref<32x32xf32, #tpu.memory_space<vmem>>, vector<32x32xf32>
    %cst = arith.constant dense<0.000000e+00> : vector<128x32xf32>
    %5 = tpu.matmul %1, %4, %cst {dimension_numbers = #tpu.dot_dimension_numbers<[1], [0], [0], [1], [0, 0, 1, 1], [], []>} : vector<128x32xf32>, vector<32x32xf32>, vector<128x32xf32> -> vector<128x32xf32>
    %c1_6 = arith.constant 1 : index
    %c0_7 = arith.constant 0 : index
    %6 = vector.load %arg3[%c1_6, %c0_7] : memref<2x32xf32, #tpu.memory_space<vmem>>, vector<1x32xf32>
    %7 = vector.broadcast %6 : vector<1x32xf32> to vector<128x32xf32>
    %8 = arith.addf %5, %7 : vector<128x32xf32>
    %9 = arith.mulf %8, %3 : vector<128x32xf32>
    %c0_8 = arith.constant 0 : index
    %c0_9 = arith.constant 0 : index
    %10 = vector.load %arg3[%c0_8, %c0_9] : memref<2x32xf32, #tpu.memory_space<vmem>>, vector<1x32xf32>
    %11 = vector.broadcast %10 : vector<1x32xf32> to vector<128x32xf32>
    %12 = arith.mulf %11, %1 : vector<128x32xf32>
    %13 = arith.addf %9, %12 : vector<128x32xf32>
    %cst_10 = arith.constant dense<0.000000e+00> : vector<128xf32>
    %14 = vector.multi_reduction <add>, %13, %cst_10 [1] : vector<128x32xf32> to vector<128xf32>
    %15 = vector.shape_cast %14 : vector<128xf32> to vector<128x1xf32>
    %c0_11 = arith.constant 0 : index
    %c0_12 = arith.constant 0 : index
    %16 = vector.load %arg4[%c0_11, %c0_12] : memref<1x128xf32, #tpu.memory_space<vmem>>, vector<1x128xf32>
    %17 = vector.broadcast %15 : vector<128x1xf32> to vector<128x128xf32>
    %18 = vector.broadcast %16 : vector<1x128xf32> to vector<128x128xf32>
    %19 = arith.addf %17, %18 : vector<128x128xf32>
    %20 = math.tanh %19 : vector<128x128xf32>
    %c0_13 = arith.constant 0 : index
    %c0_14 = arith.constant 0 : index
    %21 = vector.load %arg5[%c0_13, %c0_14] : memref<128x128xf32, #tpu.memory_space<vmem>>, vector<128x128xf32>
    tpu.vector_store %arg5[%c0_13, %c0_14], %20 {strides = array<i32>} : memref<128x128xf32, #tpu.memory_space<vmem>>, vector<128x128xf32>,
    return
  }
  func.func @transform_0(%arg0: i32) -> (i32, i32, i32) {
    %c0_i32 = arith.constant 0 : i32
    %c0_i32_0 = arith.constant 0 : i32
    %c0_i32_1 = arith.constant 0 : i32
    return %c0_i32, %arg0, %c0_i32_0 : i32, i32, i32
  }
  func.func @transform_1(%arg0: i32) -> (i32, i32) {
    %c0_i32 = arith.constant 0 : i32
    %c0_i32_0 = arith.constant 0 : i32
    %c0_i32_1 = arith.constant 0 : i32
    return %c0_i32, %c0_i32_0 : i32, i32
  }
  func.func @transform_2(%arg0: i32) -> (i32, i32) {
    %c0_i32 = arith.constant 0 : i32
    %c0_i32_0 = arith.constant 0 : i32
    %c0_i32_1 = arith.constant 0 : i32
    return %c0_i32, %c0_i32_0 : i32, i32
  }
  func.func @transform_3(%arg0: i32) -> (i32, i32) {
    %c0_i32 = arith.constant 0 : i32
    %c0_i32_0 = arith.constant 0 : i32
    %c0_i32_1 = arith.constant 0 : i32
    return %c0_i32, %c0_i32_0 : i32, i32
  }
  func.func @transform_4(%arg0: i32) -> (i32, i32) {
    %c0_i32 = arith.constant 0 : i32
    %c0_i32_0 = arith.constant 0 : i32
    return %arg0, %c0_i32 : i32, i32
  }
}

</mosaic_0001>

<llo_original>
// kernel: tpu_custom_call.1
$region0: #{tpu_custom_call.1}
  #allocation0 [shape = 'u32[]', space=smem, size = 0x4, offset = 0x4, fixed_abs, tag = 'smem constant byte address 0x4 - core index']
  #allocation1 [shape = 'u32[144,128]{1,0:T(1,128)}', space=vmem, size = 0x12000, scoped, tag = 'internal scratch']
  %s0 = inlined_call_operand.vmem [shape: f32[2,128,32], index: 0, kind: input, shape index: {}]
  %s1 = inlined_call_operand.vmem [shape: f32[32,32], index: 1, kind: input, shape index: {}]
  %s2 = inlined_call_operand.vmem [shape: f32[2,32], index: 2, kind: input, shape index: {}]
  %s3 = inlined_call_operand.vmem [shape: f32[1,128], index: 3, kind: input, shape index: {}]
  %s4 = inlined_call_operand.hbm [shape: f32[128,128], index: 4, kind: output, shape index: {}]
  %s5 = sld [smem:[#allocation0]]
  $region26: #{tpu_custom_call.1} parent=0
    _
  %s7 = ssub.s32 1, %s5
  %s8 = scalar_select 0, %s7, %s5
  $region1: #{tpu_custom_call.1} parent=0
    #allocation2 [shape = 'u8[65536]{0}', space=vmem, size = 0x10000, scoped, tag = 'output window, operand 0, single buffered']
    #allocation3 [shape = 's32[1]{0}', space=sflag, size = 0x4, scoped, tag = 'scoped memory for tpu_custom_call.1']
    %9 = vsyncpa [#allocation3], 0
    // Predicated region
    $region2: #{tpu_custom_call.1} parent=1 // pred_check
      _
    $region3: #{tpu_custom_call.1} parent=1 // pred_check_branch
      %11 = sbr.rel (0) target = $region5
    $region4: #{tpu_custom_call.1} parent=1 // pred_region
      _
    $region5: #{tpu_custom_call.1} parent=1 // pred_fallthru
      _
    // Predicated region
    $region6: #{tpu_custom_call.1} parent=1 // pred_check
      _
    $region7: #{tpu_custom_call.1} parent=1 // pred_check_branch
      %13 = sbr.rel (0) target = $region9
    $region8: #{tpu_custom_call.1} parent=1 // pred_region
      _
    $region9: #{tpu_custom_call.1} parent=1 // pred_fallthru
      _
    // Predicated region
    $region10: #{tpu_custom_call.1} parent=1 // pred_check
      _
    $region11: #{tpu_custom_call.1} parent=1 // pred_check_branch
      %15 = sbr.rel (0) target = $region13
    $region12: #{tpu_custom_call.1} parent=1 // pred_region
      _
    $region13: #{tpu_custom_call.1} parent=1 // pred_fallthru
      _
    // Predicated region
    $region14: #{tpu_custom_call.1} parent=1 // pred_check
      _
    $region15: #{tpu_custom_call.1} parent=1 // pred_check_branch
      %17 = sbr.rel (0) target = $region17
    $region16: #{tpu_custom_call.1} parent=1 // pred_region
      _
    $region17: #{tpu_custom_call.1} parent=1 // pred_fallthru
      _
    %v18 = vld [vmem:[%s0] sm:$0xff]
    %v19 = vld [vmem:[%s0 + $0x8] sm:$0xff]
    %v20 = vld [vmem:[%s0 + $0x10] sm:$0xff]
    %v21 = vld [vmem:[%s0 + $0x18] sm:$0xff]
    %v22 = vld [vmem:[%s0 + $0x20] sm:$0xff]
    %v23 = vld [vmem:[%s0 + $0x28] sm:$0xff]
    %v24 = vld [vmem:[%s0 + $0x30] sm:$0xff]
    %v25 = vld [vmem:[%s0 + $0x38] sm:$0xff]
    %v26 = vld [vmem:[%s0 + $0x40] sm:$0xff]
    %v27 = vld [vmem:[%s0 + $0x48] sm:$0xff]
    %v28 = vld [vmem:[%s0 + $0x50] sm:$0xff]
    %v29 = vld [vmem:[%s0 + $0x58] sm:$0xff]
    %v30 = vld [vmem:[%s0 + $0x60] sm:$0xff]
    %v31 = vld [vmem:[%s0 + $0x68] sm:$0xff]
    %v32 = vld [vmem:[%s0 + $0x70] sm:$0xff]
    %v33 = vld [vmem:[%s0 + $0x78] sm:$0xff]
    %s34 = scalar_lea.vmem %s0, 128
    %v35 = vld [vmem:[%s34] sm:$0xff]
    %v36 = vld [vmem:[%s34 + $0x8] sm:$0xff]
    %v37 = vld [vmem:[%s34 + $0x10] sm:$0xff]
    %v38 = vld [vmem:[%s34 + $0x18] sm:$0xff]
    %v39 = vld [vmem:[%s34 + $0x20] sm:$0xff]
    %v40 = vld [vmem:[%s34 + $0x28] sm:$0xff]
    %v41 = vld [vmem:[%s34 + $0x30] sm:$0xff]
    %v42 = vld [vmem:[%s34 + $0x38] sm:$0xff]
    %v43 = vld [vmem:[%s34 + $0x40] sm:$0xff]
    %v44 = vld [vmem:[%s34 + $0x48] sm:$0xff]
    %v45 = vld [vmem:[%s34 + $0x50] sm:$0xff]
    %v46 = vld [vmem:[%s34 + $0x58] sm:$0xff]
    %v47 = vld [vmem:[%s34 + $0x60] sm:$0xff]
    %v48 = vld [vmem:[%s34 + $0x68] sm:$0xff]
    %v49 = vld [vmem:[%s34 + $0x70] sm:$0xff]
    %v50 = vld [vmem:[%s34 + $0x78] sm:$0xff]
    %v51 = vld [vmem:[%s1] sm:$0xff]
    %v52 = vld [vmem:[%s1 + $0x8] sm:$0xff]
    %v53 = vld [vmem:[%s1 + $0x10] sm:$0xff]
    %v54 = vld [vmem:[%s1 + $0x18] sm:$0xff]
    %v55 = vld [vmem:[%s2 + $0x1] sm:$0x1]
    %v56 = vlaneseq
    %v57 = vshrl.u32 %v56, 7
    %v58 = vsub.s32 0, %v57
    %v59 = vrot.slane %v55, %v58
    %vm60 = vcmask 261120
    %v62 = vsel %vm60, %v18, 0
    %v65 = vsel %vm60, %v19, 0
    %v68 = vsel %vm60, %v20, 0
    %v71 = vsel %vm60, %v21, 0
    %v74 = vsel %vm60, %v22, 0
    %v77 = vsel %vm60, %v23, 0
    %v80 = vsel %vm60, %v24, 0
    %v83 = vsel %vm60, %v25, 0
    %v86 = vsel %vm60, %v26, 0
    %v89 = vsel %vm60, %v27, 0
    %v92 = vsel %vm60, %v28, 0
    %v95 = vsel %vm60, %v29, 0
    %v98 = vsel %vm60, %v30, 0
    %v101 = vsel %vm60, %v31, 0
    %v104 = vsel %vm60, %v32, 0
    %v107 = vsel %vm60, %v33, 0
    %109 = vmatprep.subr.mxu0 0.0
    %110 = vmatpush1.msra.mxu0 %v51
    %111 = vmatprep.subr.mxu0 0.0
    %112 = vmatpush1.msra.mxu0 %v52
    %113 = vmatprep.subr.mxu0 0.0
    %114 = vmatpush1.msra.mxu0 %v53
    %115 = vmatprep.subr.mxu0 0.0
    %116 = vmatpush1.msra.mxu0 %v54
    %117 = vmatprep.subr.mxu0 0.0
    %118 = vmatpush1.msra.mxu0 0.0
    %119 = vmatprep.subr.mxu0 0.0
    %120 = vmatpush1.msra.mxu0 0.0
    %121 = vmatprep.subr.mxu0 0.0
    %122 = vmatpush1.msra.mxu0 0.0
    %123 = vmatprep.subr.mxu0 0.0
    %124 = vmatpush1.msra.mxu0 0.0
    %125 = vmatprep.subr.mxu0 0.0
    %126 = vmatpush1.msra.mxu0 0.0
    %127 = vmatprep.subr.mxu0 0.0
    %128 = vmatpush1.msra.mxu0 0.0
    %129 = vmatprep.subr.mxu0 0.0
    %130 = vmatpush1.msra.mxu0 0.0
    %131 = vmatprep.subr.mxu0 0.0
    %132 = vmatpush1.msra.mxu0 0.0
    %133 = vmatprep.subr.mxu0 0.0
    %134 = vmatpush1.msra.mxu0 0.0
    %135 = vmatprep.subr.mxu0 0.0
    %136 = vmatpush1.msra.mxu0 0.0
    %137 = vmatprep.subr.mxu0 0.0
    %138 = vmatpush1.msra.mxu0 0.0
    %139 = vmatprep.subr.mxu0 0.0
    %140 = vmatpush1.msra.mxu0 0.0
    %141 = vmatprep.subr.mxu0 0.0
    %142 = vmatpush1.msra.mxu0 0.0
    %143 = vmatprep.subr.mxu0 0.0
    %144 = vmatpush1.msra.mxu0 0.0
    %145 = vmatprep.subr.mxu0 0.0
    %146 = vmatpush1.msra.mxu0 0.0
    %147 = vmatprep.subr.mxu0 0.0
    %148 = vmatpush1.msra.mxu0 0.0
    %149 = vmatprep.subr.mxu0 0.0
    %150 = vmatpush1.msra.mxu0 0.0
    %151 = vmatprep.subr.mxu0 0.0
    %152 = vmatpush1.msra.mxu0 0.0
    %153 = vmatprep.subr.mxu0 0.0
    %154 = vmatpush1.msra.mxu0 0.0
    %155 = vmatprep.subr.mxu0 0.0
    %156 = vmatpush1.msra.mxu0 0.0
    %157 = vmatprep.subr.mxu0 0.0
    %158 = vmatpush1.msra.mxu0 0.0
    %159 = vmatprep.subr.mxu0 0.0
    %160 = vmatpush1.msra.mxu0 0.0
    %161 = vmatprep.subr.mxu0 0.0
    %162 = vmatpush1.msra.mxu0 0.0
    %163 = vmatprep.subr.mxu0 0.0
    %164 = vmatpush1.msra.mxu0 0.0
    %165 = vmatprep.subr.mxu0 0.0
    %166 = vmatpush1.msra.mxu0 0.0
    %167 = vmatprep.subr.mxu0 0.0
    %168 = vmatpush1.msra.mxu0 0.0
    %169 = vmatprep.subr.mxu0 0.0
    %170 = vmatpush1.msra.mxu0 0.0
    %171 = vmatprep.subr.mxu0 0.0
    %172 = vmatpush1.msra.mxu0 0.0
    %173 = vmatprep.mubr.f32.mxu0 0.0
    %174 = vmatmul.mubr.f32.gmra.mrb[0].mxu0 %v62
    %v175 = vpop.f32.mrb[0].mxu0
    %v176 = vadd.f32 %v59, %v175
    %v177 = vpop.f32.mrb[0].mxu0
    %178 = vmatprep.mubr.f32.mxu0 0.0
    %179 = vmatmul.mubr.f32.gmra.mrb[0].mxu0 %v65
    %v180 = vpop.f32.mrb[0].mxu0
    %v181 = vadd.f32 %v59, %v180
    %v182 = vpop.f32.mrb[0].mxu0
    %183 = vmatprep.mubr.f32.mxu0 0.0
    %184 = vmatmul.mubr.f32.gmra.mrb[0].mxu0 %v68
    %v185 = vpop.f32.mrb[0].mxu0
    %v186 = vadd.f32 %v59, %v185
    %v187 = vpop.f32.mrb[0].mxu0
    %188 = vmatprep.mubr.f32.mxu0 0.0
    %189 = vmatmul.mubr.f32.gmra.mrb[0].mxu0 %v71
    %v190 = vpop.f32.mrb[0].mxu0
    %v191 = vadd.f32 %v59, %v190
    %v192 = vpop.f32.mrb[0].mxu0
    %193 = vmatprep.mubr.f32.mxu0 0.0
    %194 = vmatmul.mubr.f32.gmra.mrb[0].mxu0 %v74
    %v195 = vpop.f32.mrb[0].mxu0
    %v196 = vadd.f32 %v59, %v195
    %v197 = vpop.f32.mrb[0].mxu0
    %198 = vmatprep.mubr.f32.mxu0 0.0
    %199 = vmatmul.mubr.f32.gmra.mrb[0].mxu0 %v77
    %v200 = vpop.f32.mrb[0].mxu0
    %v201 = vadd.f32 %v59, %v200
    %v202 = vpop.f32.mrb[0].mxu0
    %203 = vmatprep.mubr.f32.mxu0 0.0
    %204 = vmatmul.mubr.f32.gmra.mrb[0].mxu0 %v80
    %v205 = vpop.f32.mrb[0].mxu0
    %v206 = vadd.f32 %v59, %v205
    %v207 = vpop.f32.mrb[0].mxu0
    %208 = vmatprep.mubr.f32.mxu0 0.0
    %209 = vmatmul.mubr.f32.gmra.mrb[0].mxu0 %v83
    %v210 = vpop.f32.mrb[0].mxu0
    %v211 = vadd.f32 %v59, %v210
    %v212 = vpop.f32.mrb[0].mxu0
    %213 = vmatprep.mubr.f32.mxu0 0.0
    %214 = vmatmul.mubr.f32.gmra.mrb[0].mxu0 %v86
    %v215 = vpop.f32.mrb[0].mxu0
    %v216 = vadd.f32 %v59, %v215
    %v217 = vpop.f32.mrb[0].mxu0
    %218 = vmatprep.mubr.f32.mxu0 0.0
    %219 = vmatmul.mubr.f32.gmra.mrb[0].mxu0 %v89
    %v220 = vpop.f32.mrb[0].mxu0
    %v221 = vadd.f32 %v59, %v220
    %v222 = vpop.f32.mrb[0].mxu0
    %223 = vmatprep.mubr.f32.mxu0 0.0
    %224 = vmatmul.mubr.f32.gmra.mrb[0].mxu0 %v92
    %v225 = vpop.f32.mrb[0].mxu0
    %v226 = vadd.f32 %v59, %v225
    %v227 = vpop.f32.mrb[0].mxu0
    %228 = vmatprep.mubr.f32.mxu0 0.0
    %229 = vmatmul.mubr.f32.gmra.mrb[0].mxu0 %v95
    %v230 = vpop.f32.mrb[0].mxu0
    %v231 = vadd.f32 %v59, %v230
    %v232 = vpop.f32.mrb[0].mxu0
    %233 = vmatprep.mubr.f32.mxu0 0.0
    %234 = vmatmul.mubr.f32.gmra.mrb[0].mxu0 %v98
    %v235 = vpop.f32.mrb[0].mxu0
    %v236 = vadd.f32 %v59, %v235
    %v237 = vpop.f32.mrb[0].mxu0
    %238 = vmatprep.mubr.f32.mxu0 0.0
    %239 = vmatmul.mubr.f32.gmra.mrb[0].mxu0 %v101
    %v240 = vpop.f32.mrb[0].mxu0
    %v241 = vadd.f32 %v59, %v240
    %v242 = vpop.f32.mrb[0].mxu0
    %243 = vmatprep.mubr.f32.mxu0 0.0
    %244 = vmatmul.mubr.f32.gmra.mrb[0].mxu0 %v104
    %v245 = vpop.f32.mrb[0].mxu0
    %v246 = vadd.f32 %v59, %v245
    %v247 = vpop.f32.mrb[0].mxu0
    %248 = vmatprep.mubr.f32.mxu0 0.0
    %249 = vmatmul.mubr.f32.gmra.mrb[0].mxu0 %v107
    %v250 = vpop.f32.mrb[0].mxu0
    %v251 = vadd.f32 %v59, %v250
    %v252 = vpop.f32.mrb[0].mxu0
    %253 = vdwg.mxu0
    %v254 = vmul.f32 %v176, %v35
    %v255 = vmul.f32 %v181, %v36
    %v256 = vmul.f32 %v186, %v37
    %v257 = vmul.f32 %v191, %v38
    %v258 = vmul.f32 %v196, %v39
    %v259 = vmul.f32 %v201, %v40
    %v260 = vmul.f32 %v206, %v41
    %v261 = vmul.f32 %v211, %v42
    %v262 = vmul.f32 %v216, %v43
    %v263 = vmul.f32 %v221, %v44
    %v264 = vmul.f32 %v226, %v45
    %v265 = vmul.f32 %v231, %v46
    %v266 = vmul.f32 %v236, %v47
    %v267 = vmul.f32 %v241, %v48
    %v268 = vmul.f32 %v246, %v49
    %v269 = vmul.f32 %v251, %v50
    %v270 = vld [vmem:[%s2] sm:$0x1]
    %v271 = vlaneseq
    %v272 = vshrl.u32 %v271, 7
    %v273 = vsub.s32 0, %v272
    %v274 = vrot.slane %v270, %v273
    %v275 = vmul.f32 %v274, %v18
    %v276 = vmul.f32 %v274, %v19
    %v277 = vmul.f32 %v274, %v20
    %v278 = vmul.f32 %v274, %v21
    %v279 = vmul.f32 %v274, %v22
    %v280 = vmul.f32 %v274, %v23
    %v281 = vmul.f32 %v274, %v24
    %v282 = vmul.f32 %v274, %v25
    %v283 = vmul.f32 %v274, %v26
    %v284 = vmul.f32 %v274, %v27
    %v285 = vmul.f32 %v274, %v28
    %v286 = vmul.f32 %v274, %v29
    %v287 = vmul.f32 %v274, %v30
    %v288 = vmul.f32 %v274, %v31
    %v289 = vmul.f32 %v274, %v32
    %v290 = vmul.f32 %v274, %v33
    %v291 = vadd.f32 %v254, %v275
    %v292 = vadd.f32 %v255, %v276
    %v293 = vadd.f32 %v256, %v277
    %v294 = vadd.f32 %v257, %v278
    %v295 = vadd.f32 %v258, %v279
    %v296 = vadd.f32 %v259, %v280
    %v297 = vadd.f32 %v260, %v281
    %v298 = vadd.f32 %v261, %v282
    %v299 = vadd.f32 %v262, %v283
    %v300 = vadd.f32 %v263, %v284
    %v301 = vadd.f32 %v264, %v285
    %v302 = vadd.f32 %v265, %v286
    %v303 = vadd.f32 %v266, %v287
    %v304 = vadd.f32 %v267, %v288
    %v305 = vadd.f32 %v268, %v289
    %v306 = vadd.f32 %v269, %v290
    %v307 = vsel %vm60, %v291, 0.0
    %308 = vadd.xlane.f32.xlu0 %v307
    %v309 = vpop.xlane.xlu0 %308
    %v310 = vsel %vm60, %v292, 0.0
    %311 = vadd.xlane.f32.xlu0 %v310
    %v312 = vpop.xlane.xlu0 %311
    %v313 = vsel %vm60, %v293, 0.0
    %314 = vadd.xlane.f32.xlu0 %v313
    %v315 = vpop.xlane.xlu0 %314
    %v316 = vsel %vm60, %v294, 0.0
    %317 = vadd.xlane.f32.xlu0 %v316
    %v318 = vpop.xlane.xlu0 %317
    %v319 = vsel %vm60, %v295, 0.0
    %320 = vadd.xlane.f32.xlu0 %v319
    %v321 = vpop.xlane.xlu0 %320
    %v322 = vsel %vm60, %v296, 0.0
    %323 = vadd.xlane.f32.xlu0 %v322
    %v324 = vpop.xlane.xlu0 %323
    %v325 = vsel %vm60, %v297, 0.0
    %326 = vadd.xlane.f32.xlu0 %v325
    %v327 = vpop.xlane.xlu0 %326
    %v328 = vsel %vm60, %v298, 0.0
    %329 = vadd.xlane.f32.xlu0 %v328
    %v330 = vpop.xlane.xlu0 %329
    %v331 = vsel %vm60, %v299, 0.0
    %332 = vadd.xlane.f32.xlu0 %v331
    %v333 = vpop.xlane.xlu0 %332
    %v334 = vsel %vm60, %v300, 0.0
    %335 = vadd.xlane.f32.xlu0 %v334
    %v336 = vpop.xlane.xlu0 %335
    %v337 = vsel %vm60, %v301, 0.0
    %338 = vadd.xlane.f32.xlu0 %v337
    %v339 = vpop.xlane.xlu0 %338
    %v340 = vsel %vm60, %v302, 0.0
    %341 = vadd.xlane.f32.xlu0 %v340
    %v342 = vpop.xlane.xlu0 %341
    %v343 = vsel %vm60, %v303, 0.0
    %344 = vadd.xlane.f32.xlu0 %v343
    %v345 = vpop.xlane.xlu0 %344
    %v346 = vsel %vm60, %v304, 0.0
    %347 = vadd.xlane.f32.xlu0 %v346
    %v348 = vpop.xlane.xlu0 %347
    %v349 = vsel %vm60, %v305, 0.0
    %350 = vadd.xlane.f32.xlu0 %v349
    %v351 = vpop.xlane.xlu0 %350
    %v352 = vsel %vm60, %v306, 0.0
    %353 = vadd.xlane.f32.xlu0 %v352
    %v354 = vpop.xlane.xlu0 %353
    %v355 = vld [vmem:[%s3] sm:$0x1]
    %v357 = vlaneseq
    %v358 = vshrl.u32 %v357, 7
    %v359 = vsub.s32 0, %v358
    %v360 = vrot.slane %v355, %v359
    %v362 = vadd.f32 %v309, %v360
    %v363 = vadd.f32 %v312, %v360
    %v364 = vadd.f32 %v315, %v360
    %v365 = vadd.f32 %v318, %v360
    %v366 = vadd.f32 %v321, %v360
    %v367 = vadd.f32 %v324, %v360
    %v368 = vadd.f32 %v327, %v360
    %v369 = vadd.f32 %v330, %v360
    %v370 = vadd.f32 %v333, %v360
    %v371 = vadd.f32 %v336, %v360
    %v372 = vadd.f32 %v339, %v360
    %v373 = vadd.f32 %v342, %v360
    %v374 = vadd.f32 %v345, %v360
    %v375 = vadd.f32 %v348, %v360
    %v376 = vadd.f32 %v351, %v360
    %v377 = vadd.f32 %v354, %v360
    %v378 = vtanh.pop %v362
    %v379 = vtanh.pop %v363
    %v380 = vtanh.pop %v364
    %v381 = vtanh.pop %v365
    %v382 = vtanh.pop %v366
    %v383 = vtanh.pop %v367
    %v384 = vtanh.pop %v368
    %v385 = vtanh.pop %v369
    %v386 = vtanh.pop %v370
    %v387 = vtanh.pop %v371
    %v388 = vtanh.pop %v372
    %v389 = vtanh.pop %v373
    %v390 = vtanh.pop %v374
    %v391 = vtanh.pop %v375
    %v392 = vtanh.pop %v376
    %v393 = vtanh.pop %v377
    %394 = vst [vmem:[#allocation2] sm:$0xff] %v378
    %395 = vst [vmem:[#allocation2 + $0x8] sm:$0xff] %v379
    %396 = vst [vmem:[#allocation2 + $0x10] sm:$0xff] %v380
    %397 = vst [vmem:[#allocation2 + $0x18] sm:$0xff] %v381
    %398 = vst [vmem:[#allocation2 + $0x20] sm:$0xff] %v382
    %399 = vst [vmem:[#allocation2 + $0x28] sm:$0xff] %v383
    %400 = vst [vmem:[#allocation2 + $0x30] sm:$0xff] %v384
    %401 = vst [vmem:[#allocation2 + $0x38] sm:$0xff] %v385
    %402 = vst [vmem:[#allocation2 + $0x40] sm:$0xff] %v386
    %403 = vst [vmem:[#allocation2 + $0x48] sm:$0xff] %v387
    %404 = vst [vmem:[#allocation2 + $0x50] sm:$0xff] %v388
    %405 = vst [vmem:[#allocation2 + $0x58] sm:$0xff] %v389
    %406 = vst [vmem:[#allocation2 + $0x60] sm:$0xff] %v390
    %407 = vst [vmem:[#allocation2 + $0x68] sm:$0xff] %v391
    %408 = vst [vmem:[#allocation2 + $0x70] sm:$0xff] %v392
    %409 = vst [vmem:[#allocation2 + $0x78] sm:$0xff] %v393
    // Predicated region
    $region18: #{tpu_custom_call.1} parent=1 // pred_check
      _
    $region19: #{tpu_custom_call.1} parent=1 // pred_check_branch
      %411 = sbr.rel (0) target = $region21
    $region20: #{tpu_custom_call.1} parent=1 // pred_region
      %s413 = ssub.s32 2048, 2048
      %414 = vsyncadd [#allocation3], %s413
      %s415 = sshll.u32 [#allocation2], 4
      %s416 = int_to_ptr.vmem [resolvable:$true] %s415
      %421 = dma.vmem_to_hbm [thread:$0]  %s416, 2048, %s4, [#allocation3], 128, 128, 8
    $region21: #{tpu_custom_call.1} parent=1 // pred_fallthru
      _
    // Predicated region
    $region22: #{tpu_custom_call.1} parent=1 // pred_check
      _
    $region23: #{tpu_custom_call.1} parent=1 // pred_check_branch
      %423 = sbr.rel (0) target = $region25
    $region24: #{tpu_custom_call.1} parent=1 // pred_region
      %424 = dma.done [#allocation3], 2048
    $region25: #{tpu_custom_call.1} parent=1 // pred_fallthru
      _
    %425 = vsyncpa [#allocation3], 1

</llo_original>
